<compile_context>
chip_gen: v7x
topology: tpu7x:2x2x1
jax: 0.10.0
libtpu: 0.0.40
codegen_flags: <defaults>
</compile_context>

<pallas_src>
import functools
import math

import jax
import jax.numpy as jnp
from jax.experimental import pallas as pl
from jax.experimental.pallas import tpu as pltpu


def _round_up(x, m):
    return (x + m - 1) // m * m


def _fc_decoder_kernel(x_ref, w_ref, b_ref, o_ref, *,
                       in_dim, hid_pad, mid_pad, cls_w, ncls):
    # x_ref : (TILE_B, in_dim)                      f32 (cast to bf16 here)
    # w_ref : (in_dim + hid_pad + mid_pad, out_w)   bf16, packed [W1; W2; W3]
    # b_ref : (8, out_w)                            f32, rows 0..2 = b1, b2, b3
    # o_ref : (TILE_B, ncls)                        f32
    w1 = w_ref[0:in_dim, 0:hid_pad]
    w2 = w_ref[in_dim:in_dim + hid_pad, 0:mid_pad]
    w3 = w_ref[in_dim + hid_pad:in_dim + hid_pad + mid_pad, 0:cls_w]
    b1 = b_ref[0:1, 0:hid_pad]
    b2 = b_ref[1:2, 0:mid_pad]
    b3 = b_ref[2:3, 0:cls_w]

    x = x_ref[...].astype(jnp.bfloat16)   # cast in-kernel; no wrapper HBM pass

    # Layer 1: Linear + Sigmoid  (dropout1: identity in eval mode)
    h1 = jnp.dot(x, w1, preferred_element_type=jnp.float32) + b1
    h1 = 0.5 * jnp.tanh(0.5 * h1) + 0.5   # sigmoid via tanh -> EUP slot

    # Layer 2: Linear + Sigmoid  (dropout2: identity in eval mode)
    h2 = jnp.dot(h1.astype(jnp.bfloat16), w2, preferred_element_type=jnp.float32) + b2
    h2 = 0.5 * jnp.tanh(0.5 * h2) + 0.5

    # Layer 3: Linear
    out = jnp.dot(h2.astype(jnp.bfloat16), w3, preferred_element_type=jnp.float32) + b3
    o_ref[...] = out[:, :ncls].astype(o_ref.dtype)


def fc_decoder_forward(x, params, *, tile_b=None, min_pallas_batch=64):
    """x: [B, dim_feedforward * input_num] -> [B, num_class]."""
    w1, b1, w2, b2, w3, b3 = params
    B, in_dim = x.shape
    hid = w1.shape[1]
    mid = w2.shape[1]
    ncls = w3.shape[1]

    # Small-batch fallback: a single fused XLA graph beats any custom-call
    # launch + tile padding at tiny B.
    if B < min_pallas_batch:
        h1 = jax.nn.sigmoid(x @ w1 + b1.reshape(1, -1))
        h2 = jax.nn.sigmoid(h1 @ w2 + b2.reshape(1, -1))
        return h2 @ w3 + b3.reshape(1, -1)

    hid_pad = _round_up(hid, 128)
    mid_pad = _round_up(mid, 128)
    cls_w = _round_up(ncls, 128)
    out_w = max(hid_pad, mid_pad, cls_w)

    # Batch tile: big (HBM-streaming bound), but keep >= 2 grid steps so the
    # "parallel" axis can shard across v7x's two TensorCores.
    if tile_b is None:
        tile_b = min(512, _round_up(max(-(-B // 2), 8), 8))
    tile_b = max(8, _round_up(tile_b, 8))
    b_pad = _round_up(B, tile_b)

    # Only pad the batch dim if it doesn't divide; feature dim stays unpadded
    # and f32 (cast happens inside the kernel).
    x_in = x if b_pad == B else jnp.pad(x, ((0, b_pad - B), (0, 0)))

    # Pack padded weights into one resident bf16 slab, biases into one f32 slab.
    # Zero-padded *rows* of W2/W3 annihilate the sigmoid(0)=0.5 padded lanes of
    # the previous activation.  in_dim (288) is a multiple of 16, so the static
    # row slices inside the kernel stay sublane-tile aligned for bf16.
    w1_p = jnp.pad(w1.astype(jnp.bfloat16), ((0, 0), (0, out_w - hid)))
    w2_p = jnp.pad(w2.astype(jnp.bfloat16), ((0, hid_pad - hid), (0, out_w - mid)))
    w3_p = jnp.pad(w3.astype(jnp.bfloat16), ((0, mid_pad - mid), (0, out_w - ncls)))
    w_slab = jnp.concatenate([w1_p, w2_p, w3_p], axis=0)

    def _pad_bias(b, n):
        return jnp.pad(b.reshape(1, -1).astype(jnp.float32), ((0, 0), (0, out_w - n)))

    b_slab = jnp.concatenate(
        [_pad_bias(b1, hid), _pad_bias(b2, mid), _pad_bias(b3, ncls),
         jnp.zeros((5, out_w), jnp.float32)], axis=0)

    kernel = functools.partial(
        _fc_decoder_kernel,
        in_dim=in_dim, hid_pad=hid_pad, mid_pad=mid_pad, cls_w=cls_w, ncls=ncls)

    grid = (b_pad // tile_b,)
    out_p = pl.pallas_call(
        kernel,
        out_shape=jax.ShapeDtypeStruct((b_pad, ncls), jnp.float32),
        grid_spec=pltpu.PrefetchScalarGridSpec(
            num_scalar_prefetch=0,
            grid=grid,
            in_specs=[
                # Streamed x tile: last dim = full array dim (no 128 padding).
                pl.BlockSpec((tile_b, in_dim), lambda i: (i, 0)),
                # Resident packed weights / biases (same block every step).
                pl.BlockSpec(w_slab.shape, lambda i: (0, 0)),
                pl.BlockSpec(b_slab.shape, lambda i: (0, 0)),
            ],
            # Narrow output: last dim = num_class (full array dim), f32.
            out_specs=pl.BlockSpec((tile_b, ncls), lambda i: (i, 0)),
        ),
        compiler_params=pltpu.CompilerParams(
            dimension_semantics=("parallel",)),
    )(x_in, w_slab, b_slab)

    return out_p if b_pad == B else out_p[:B]


def init_linear_params(key, in_features, out_features):
    """Deterministic init mimicking nn.Linear default (uniform +-1/sqrt(fan_in)).
    Returns W with shape (in_features, out_features), b with shape (1, out_features)."""
    kw, kb = jax.random.split(key)
    bound = 1.0 / math.sqrt(in_features)
    w = jax.random.uniform(kw, (in_features, out_features), jnp.float32, -bound, bound)
    b = jax.random.uniform(kb, (1, out_features), jnp.float32, -bound, bound)
    return w, b


def reference_forward(x, params):
    w1, b1, w2, b2, w3, b3 = params
    h1 = jax.nn.sigmoid(x @ w1 + b1)
    h2 = jax.nn.sigmoid(h1 @ w2 + b2)
    return h2 @ w3 + b3


if __name__ == "__main__":
    # Shapes implied by the module:
    #   dim_feedforward=96, input_num=3 -> input dim 288, hidden 96, mid 32, num_class=16
    dim_feedforward = 96
    input_num = 3
    num_class = 16

    in_dim = dim_feedforward * input_num        # 288
    mid_dim = dim_feedforward // input_num      # 32

    key = jax.random.PRNGKey(0)
    kx, ks, k1, k2, k3 = jax.random.split(key, 5)

    w1, b1 = init_linear_params(k1, in_dim, dim_feedforward)
    w2, b2 = init_linear_params(k2, dim_feedforward, mid_dim)
    w3, b3 = init_linear_params(k3, mid_dim, num_class)
    params = (w1, b1, w2, b2, w3, b3)

    # --- Pallas path (batch large enough to stream >=2 batch tiles) ---------
    batch = 256
    x = jax.random.normal(kx, (batch, in_dim), jnp.float32)
    out = jax.block_until_ready(jax.jit(fc_decoder_forward)(x, params))
    ref = reference_forward(x, params)
    assert out.shape == (batch, num_class)
    max_err = float(jnp.max(jnp.abs(out - ref)))
    # bf16 MXU inputs vs f32 reference -> loosened tolerance.
    assert max_err < 5e-2, f"pallas path mismatch vs reference: max abs err {max_err}"

    # --- Small-batch fallback path (pure fused XLA, exact) ------------------
    xs = jax.random.normal(ks, (8, in_dim), jnp.float32)
    outs = jax.block_until_ready(jax.jit(fc_decoder_forward)(xs, params))
    refs = reference_forward(xs, params)
    max_err_s = float(jnp.max(jnp.abs(outs - refs)))
    assert outs.shape == (8, num_class)
    assert max_err_s < 1e-5, f"fallback path mismatch: max abs err {max_err_s}"

    print("KERNEL_OK")
</pallas_src>

<mosaic_0001>
module attributes {stable_mosaic.version = 11 : i64} {
  func.func @_fc_decoder_kernel(%arg0: i32, %arg1: memref<128x288xf32, #tpu.memory_space<vmem>>, %arg2: memref<544x128xbf16, #tpu.memory_space<vmem>>, %arg3: memref<8x128xf32, #tpu.memory_space<vmem>>, %arg4: memref<128x16xf32, #tpu.memory_space<vmem>>) attributes {dimension_semantics = [#tpu.dimension_semantics<parallel>], iteration_bounds = array<i64: 2>, scalar_prefetch = 0 : i64, scratch_operands = 0 : i64, tpu.core_type = #tpu.core_type<tc>, window_params = [{transform_indices = @transform_0, window_bounds = array<i64: 128, 288>}, {pipeline_mode = #tpu.pipeline_mode<synchronous>, transform_indices = @transform_1, window_bounds = array<i64: 544, 128>}, {pipeline_mode = #tpu.pipeline_mode<synchronous>, transform_indices = @transform_2, window_bounds = array<i64: 8, 128>}, {transform_indices = @transform_3, window_bounds = array<i64: 128, 16>}]} {
    %c0 = arith.constant 0 : index
    %c0_0 = arith.constant 0 : index
    %0 = vector.load %arg2[%c0, %c0_0] : memref<544x128xbf16, #tpu.memory_space<vmem>>, vector<288x128xbf16>
    %c288 = arith.constant 288 : index
    %c0_1 = arith.constant 0 : index
    %1 = vector.load %arg2[%c288, %c0_1] : memref<544x128xbf16, #tpu.memory_space<vmem>>, vector<128x128xbf16>
    %c416 = arith.constant 416 : index
    %c0_2 = arith.constant 0 : index
    %2 = vector.load %arg2[%c416, %c0_2] : memref<544x128xbf16, #tpu.memory_space<vmem>>, vector<128x128xbf16>
    %c0_3 = arith.constant 0 : index
    %c0_4 = arith.constant 0 : index
    %3 = vector.load %arg3[%c0_3, %c0_4] : memref<8x128xf32, #tpu.memory_space<vmem>>, vector<1x128xf32>
    %c1 = arith.constant 1 : index
    %c0_5 = arith.constant 0 : index
    %4 = vector.load %arg3[%c1, %c0_5] : memref<8x128xf32, #tpu.memory_space<vmem>>, vector<1x128xf32>
    %c2 = arith.constant 2 : index
    %c0_6 = arith.constant 0 : index
    %5 = vector.load %arg3[%c2, %c0_6] : memref<8x128xf32, #tpu.memory_space<vmem>>, vector<1x128xf32>
    %c0_7 = arith.constant 0 : index
    %c0_8 = arith.constant 0 : index
    %6 = vector.load %arg1[%c0_7, %c0_8] : memref<128x288xf32, #tpu.memory_space<vmem>>, vector<128x288xf32>
    %7 = arith.truncf %6 : vector<128x288xf32> to vector<128x288xbf16>
    %cst = arith.constant dense<0.000000e+00> : vector<128x128xf32>
    %8 = tpu.matmul %7, %0, %cst {dimension_numbers = #tpu.dot_dimension_numbers<[1], [0], [0], [1], [0, 0, 1, 1], [], []>} : vector<128x288xbf16>, vector<288x128xbf16>, vector<128x128xf32> -> vector<128x128xf32>
    %9 = vector.broadcast %3 : vector<1x128xf32> to vector<128x128xf32>
    %10 = arith.addf %8, %9 : vector<128x128xf32>
    %cst_9 = arith.constant 5.000000e-01 : f32
    %11 = vector.broadcast %cst_9 : f32 to vector<128x128xf32>
    %12 = arith.mulf %11, %10 : vector<128x128xf32>
    %13 = math.tanh %12 : vector<128x128xf32>
    %cst_10 = arith.constant 5.000000e-01 : f32
    %14 = vector.broadcast %cst_10 : f32 to vector<128x128xf32>
    %15 = arith.mulf %14, %13 : vector<128x128xf32>
    %cst_11 = arith.constant 5.000000e-01 : f32
    %16 = vector.broadcast %cst_11 : f32 to vector<128x128xf32>
    %17 = arith.addf %15, %16 : vector<128x128xf32>
    %18 = arith.truncf %17 : vector<128x128xf32> to vector<128x128xbf16>
    %cst_12 = arith.constant dense<0.000000e+00> : vector<128x128xf32>
    %19 = tpu.matmul %18, %1, %cst_12 {dimension_numbers = #tpu.dot_dimension_numbers<[1], [0], [0], [1], [0, 0, 1, 1], [], []>} : vector<128x128xbf16>, vector<128x128xbf16>, vector<128x128xf32> -> vector<128x128xf32>
    %20 = vector.broadcast %4 : vector<1x128xf32> to vector<128x128xf32>
    %21 = arith.addf %19, %20 : vector<128x128xf32>
    %cst_13 = arith.constant 5.000000e-01 : f32
    %22 = vector.broadcast %cst_13 : f32 to vector<128x128xf32>
    %23 = arith.mulf %22, %21 : vector<128x128xf32>
    %24 = math.tanh %23 : vector<128x128xf32>
    %cst_14 = arith.constant 5.000000e-01 : f32
    %25 = vector.broadcast %cst_14 : f32 to vector<128x128xf32>
    %26 = arith.mulf %25, %24 : vector<128x128xf32>
    %cst_15 = arith.constant 5.000000e-01 : f32
    %27 = vector.broadcast %cst_15 : f32 to vector<128x128xf32>
    %28 = arith.addf %26, %27 : vector<128x128xf32>
    %29 = arith.truncf %28 : vector<128x128xf32> to vector<128x128xbf16>
    %cst_16 = arith.constant dense<0.000000e+00> : vector<128x128xf32>
    %30 = tpu.matmul %29, %2, %cst_16 {dimension_numbers = #tpu.dot_dimension_numbers<[1], [0], [0], [1], [0, 0, 1, 1], [], []>} : vector<128x128xbf16>, vector<128x128xbf16>, vector<128x128xf32> -> vector<128x128xf32>
    %31 = vector.broadcast %5 : vector<1x128xf32> to vector<128x128xf32>
    %32 = arith.addf %30, %31 : vector<128x128xf32>
    %33 = vector.extract_strided_slice %32 {offsets = [0, 0], sizes = [128, 16], strides = [1, 1]} : vector<128x128xf32> to vector<128x16xf32>
    %c0_17 = arith.constant 0 : index
    %c0_18 = arith.constant 0 : index
    %34 = vector.load %arg4[%c0_17, %c0_18] : memref<128x16xf32, #tpu.memory_space<vmem>>, vector<128x16xf32>
    tpu.vector_store %arg4[%c0_17, %c0_18], %33 {strides = array<i32>} : memref<128x16xf32, #tpu.memory_space<vmem>>, vector<128x16xf32>,
    return
  }
  func.func @transform_0(%arg0: i32) -> (i32, i32) {
    %c0_i32 = arith.constant 0 : i32
    %c0_i32_0 = arith.constant 0 : i32
    return %arg0, %c0_i32 : i32, i32
  }
  func.func @transform_1(%arg0: i32) -> (i32, i32) {
    %c0_i32 = arith.constant 0 : i32
    %c0_i32_0 = arith.constant 0 : i32
    %c0_i32_1 = arith.constant 0 : i32
    return %c0_i32, %c0_i32_0 : i32, i32
  }
  func.func @transform_2(%arg0: i32) -> (i32, i32) {
    %c0_i32 = arith.constant 0 : i32
    %c0_i32_0 = arith.constant 0 : i32
    %c0_i32_1 = arith.constant 0 : i32
    return %c0_i32, %c0_i32_0 : i32, i32
  }
  func.func @transform_3(%arg0: i32) -> (i32, i32) {
    %c0_i32 = arith.constant 0 : i32
    %c0_i32_0 = arith.constant 0 : i32
    return %arg0, %c0_i32 : i32, i32
  }
}

</mosaic_0001>

<llo_original>
// kernel: fc_decoder_forward.1
$region0: #{fc_decoder_forward.1}
  #allocation0 [shape = 'u32[]', space=smem, size = 0x4, offset = 0x4, fixed_abs, tag = 'smem constant byte address 0x4 - core index']
  #allocation1 [shape = 'u32[144,128]{1,0:T(1,128)}', space=vmem, size = 0x12000, scoped, tag = 'internal scratch']
  %s0 = inlined_call_operand.vmem [shape: f32[256,288], index: 0, kind: input, shape index: {}]
  %s1 = inlined_call_operand.vmem [shape: bf16[544,128], index: 1, kind: input, shape index: {}]
  %s2 = inlined_call_operand.vmem [shape: f32[8,128], index: 2, kind: input, shape index: {}]
  %s3 = inlined_call_operand.vmem [shape: f32[256,16], index: 3, kind: output, shape index: {}]
  %s4 = sld [smem:[#allocation0]]
  $region45: #{fc_decoder_forward.1} parent=0
    _
  %s6 = ssub.s32 1, %s4
  %s7 = scalar_select 0, %s6, %s4
  loop: start=0, step=1, limit=4
  $region2: #{fc_decoder_forward.1} parent=0 // loop_pre_header
    _
  $region3: #{fc_decoder_forward.1} parent=0 // loop_header
    %s9 = sphi 0, %s13
    %p10 = scmp.ge.s32.totalorder %s9, 4
    %s19 = sphi 0, %s21
    %s22 = sphi 0, %s19
    %s23 = sphi 0, %s22
    %s39 = sphi 0, %s23
    %s43 = sphi 0, %s43
    %s45 = sphi 0, %s43
    %s46 = sphi 0, %s45
    %s60 = sphi 0, %s46
    %s64 = sphi 0, %s64
    %s66 = sphi 0, %s64
    %s67 = sphi 0, %s66
    %s81 = sphi 0, %s67
    %s87 = sphi 0, %s89
    %s90 = sphi 0, %s87
    %s91 = sphi 0, %s90
    %s107 = sphi 0, %s91
  $region4: #{fc_decoder_forward.1} parent=0 // loop_header_branch
    %12 = sbr.rel (%p10) target = $region8
  $region5: #{fc_decoder_forward.1} parent=0 // loop_body
    %s14 = ssub.s32 %s9, 1
    %s15 = ssub.s32 %s9, 2
    %s16 = sadd.s32 %s9, 1
    %s17 = ssub.s32 %s9, %s16
    %p18 = scmp.eq.s32.totalorder %s17, 0
    %s20 = sadd.s32 %s19, 1
    %s21 = scalar_select %p18, %s19, %s20
    %p24 = pneg %p18
    %p25 = scmp.eq.s32.totalorder %s9, 1
    %p26 = por %p24, %p25
    %p27 = scmp.ne.s32.totalorder %s19, %s22
    %p28 = scmp.eq.s32.totalorder %s9, 0
    %p29 = por %p27, %p28
    %p30 = scmp.ne.s32.totalorder %s19, %s22
    %p31 = scmp.eq.s32.totalorder %s14, 1
    %p32 = por %p30, %p31
    %p33 = scmp.ne.s32.totalorder %s22, %s23
    %p34 = scmp.eq.s32.totalorder %s14, 0
    %p35 = por %p33, %p34
    %p36 = scmp.ne.s32.totalorder %s22, %s23
    %p37 = scmp.eq.s32.totalorder %s15, 1
    %p38 = por %p36, %p37
    %p40 = scmp.ne.s32.totalorder %s23, %s39
    %p41 = scmp.eq.s32.totalorder %s15, 0
    %p42 = por %p40, %p41
    %s44 = sadd.s32 %s43, 1
    %p47 = scmp.eq.s32.totalorder %s9, 1
    %p48 = scmp.ne.s32.totalorder %s43, %s45
    %p49 = scmp.eq.s32.totalorder %s9, 0
    %p50 = por %p48, %p49
    %p51 = scmp.ne.s32.totalorder %s43, %s45
    %p52 = scmp.eq.s32.totalorder %s14, 1
    %p53 = por %p51, %p52
    %p54 = scmp.ne.s32.totalorder %s45, %s46
    %p55 = scmp.eq.s32.totalorder %s14, 0
    %p56 = por %p54, %p55
    %p57 = scmp.ne.s32.totalorder %s45, %s46
    %p58 = scmp.eq.s32.totalorder %s15, 1
    %p59 = por %p57, %p58
    %p61 = scmp.ne.s32.totalorder %s46, %s60
    %p62 = scmp.eq.s32.totalorder %s15, 0
    %p63 = por %p61, %p62
    %s65 = sadd.s32 %s64, 1
    %p68 = scmp.eq.s32.totalorder %s9, 1
    %p69 = scmp.ne.s32.totalorder %s64, %s66
    %p70 = scmp.eq.s32.totalorder %s9, 0
    %p71 = por %p69, %p70
    %p72 = scmp.ne.s32.totalorder %s64, %s66
    %p73 = scmp.eq.s32.totalorder %s14, 1
    %p74 = por %p72, %p73
    %p75 = scmp.ne.s32.totalorder %s66, %s67
    %p76 = scmp.eq.s32.totalorder %s14, 0
    %p77 = por %p75, %p76
    %p78 = scmp.ne.s32.totalorder %s66, %s67
    %p79 = scmp.eq.s32.totalorder %s15, 1
    %p80 = por %p78, %p79
    %p82 = scmp.ne.s32.totalorder %s67, %s81
    %p83 = scmp.eq.s32.totalorder %s15, 0
    %p84 = por %p82, %p83
    %s85 = ssub.s32 %s9, %s16
    %p86 = scmp.eq.s32.totalorder %s85, 0
    %s88 = sadd.s32 %s87, 1
    %s89 = scalar_select %p86, %s87, %s88
    %p92 = pneg %p86
    %p93 = scmp.eq.s32.totalorder %s9, 1
    %p94 = por %p92, %p93
    %p95 = scmp.ne.s32.totalorder %s87, %s90
    %p96 = scmp.eq.s32.totalorder %s9, 0
    %p97 = por %p95, %p96
    %p98 = scmp.ne.s32.totalorder %s87, %s90
    %p99 = scmp.eq.s32.totalorder %s14, 1
    %p100 = por %p98, %p99
    %p101 = scmp.ne.s32.totalorder %s90, %s91
    %p102 = scmp.eq.s32.totalorder %s14, 0
    %p103 = por %p101, %p102
    %p104 = scmp.ne.s32.totalorder %s90, %s91
    %p105 = scmp.eq.s32.totalorder %s15, 1
    %p106 = por %p104, %p105
    %p108 = scmp.ne.s32.totalorder %s91, %s107
    %p109 = scmp.eq.s32.totalorder %s15, 0
    %p110 = por %p108, %p109
    %p111 = scmp.le.s32.totalorder 1, %s9
    %p112 = scmp.lt.s32.totalorder %s9, 3
    %p113 = pnand %p111, %p112
    %p114 = pneg %p113
    // Predicated region
    $region9: #{fc_decoder_forward.1} parent=5 // pred_check
      _
    $region10: #{fc_decoder_forward.1} parent=5 // pred_check_branch
      %116 = sbr.rel (%p113) target = $region12
    $region11: #{fc_decoder_forward.1} parent=5 // pred_region
      %s117 = ssub.s32 %s9, 1
      // Predicated region
      $region13: #{fc_decoder_forward.1} parent=11 // pred_check
        %p118 = pneg %p56
      $region14: #{fc_decoder_forward.1} parent=11 // pred_check_branch
        %120 = sbr.rel (%p118) target = $region16
      $region15: #{fc_decoder_forward.1} parent=11 // pred_region
        _
      $region16: #{fc_decoder_forward.1} parent=11 // pred_fallthru
        _
      // Predicated region
      $region17: #{fc_decoder_forward.1} parent=11 // pred_check
        %p121 = pneg %p77
      $region18: #{fc_decoder_forward.1} parent=11 // pred_check_branch
        %123 = sbr.rel (%p121) target = $region20
      $region19: #{fc_decoder_forward.1} parent=11 // pred_region
        _
      $region20: #{fc_decoder_forward.1} parent=11 // pred_fallthru
        _
    $region12: #{fc_decoder_forward.1} parent=5 // pred_fallthru
      _
    %p124 = scmp.lt.s32.totalorder %s9, 2
    // Predicated region
    $region21: #{fc_decoder_forward.1} parent=5 // pred_check
      %p125 = pneg %p124
    $region22: #{fc_decoder_forward.1} parent=5 // pred_check_branch
      %127 = sbr.rel (%p125) target = $region24
    $region23: #{fc_decoder_forward.1} parent=5 // pred_region
      // Predicated region
      $region25: #{fc_decoder_forward.1} parent=23 // pred_check
        %p128 = pneg %p29
      $region26: #{fc_decoder_forward.1} parent=23 // pred_check_branch
        %130 = sbr.rel (%p128) target = $region28
      $region27: #{fc_decoder_forward.1} parent=23 // pred_region
        %s131 = smul.u32 16, %s9
        %p132 = scmp.lt.s32.totalorder %s131, 31
        %s133 = scalar_select %p132, %s131, 31
        %s134 = smul.addr %s133, 3
        %s135 = smul.addr %s134, 8
        %s136 = scalar_lea.vmem %s0, %s135
        %s137 = smul.u32 16, %s9
      $region28: #{fc_decoder_forward.1} parent=23 // pred_fallthru
        _
    $region24: #{fc_decoder_forward.1} parent=5 // pred_fallthru
      _
    %p138 = scmp.le.s32.totalorder 1, %s9
    %p139 = scmp.lt.s32.totalorder %s9, 3
    %p140 = pnand %p138, %p139
    %p141 = pneg %p140
    // Predicated region
    $region29: #{fc_decoder_forward.1} parent=5 // pred_check
      _
    $region30: #{fc_decoder_forward.1} parent=5 // pred_check_branch
      %143 = sbr.rel (%p140) target = $region32
    $region31: #{fc_decoder_forward.1} parent=5 // pred_region
      %s144 = ssub.s32 %s9, 1
      %s145 = smul.u32 16, %s14
      %p146 = scmp.lt.s32.totalorder %s145, 31
      %s147 = scalar_select %p146, %s145, 31
      %s148 = smul.addr %s147, 3
      %s149 = smul.addr %s148, 8
      %s150 = scalar_lea.vmem %s0, %s149
      %p151 = pneg %p35
      %p152 = pneg %p32
      %p153 = pneg %p56
      %p154 = pneg %p53
      %p155 = pneg %p77
      %p156 = pneg %p74
      %p157 = pneg %p103
      %p158 = pneg %p100
      %s159 = smul.u32 16, %s14
      %p160 = scmp.lt.s32.totalorder %s159, 31
      %s161 = scalar_select %p160, %s159, 31
      %s162 = smul.addr %s161, 8
      %s163 = scalar_lea.vmem %s3, %s162
      %s164 = smul.u32 16, %s14
      %p165 = scmp.lt.s32.totalorder %s164, 31
      %s166 = scalar_select %p165, %s164, 31
      %s167 = smul.addr %s166, 3
      %s168 = smul.addr %s167, 8
      %s169 = scalar_lea.vmem %s0, %s168
      %s170 = smul.u32 16, %s14
      %s171 = smul.u32 16, %s14
      %p172 = scmp.lt.s32.totalorder %s171, 31
      %s173 = scalar_select %p172, %s171, 31
      %s174 = smul.addr %s173, 8
      %s175 = scalar_lea.vmem %s3, %s174
      %s176 = smul.u32 16, %s14
      %v178 = vld [vmem:[%s1] sm:$0xf]
      %v179 = vld [vmem:[%s1 + $0x4] sm:$0xf]
      %v180 = vld [vmem:[%s1 + $0x8] sm:$0xf]
      %v181 = vld [vmem:[%s1 + $0xc] sm:$0xf]
      %v182 = vld [vmem:[%s1 + $0x10] sm:$0xf]
      %v183 = vld [vmem:[%s1 + $0x14] sm:$0xf]
      %v184 = vld [vmem:[%s1 + $0x18] sm:$0xf]
      %v185 = vld [vmem:[%s1 + $0x1c] sm:$0xf]
      %v186 = vld [vmem:[%s1 + $0x20] sm:$0xf]
      %v187 = vld [vmem:[%s1 + $0x24] sm:$0xf]
      %v188 = vld [vmem:[%s1 + $0x28] sm:$0xf]
      %v189 = vld [vmem:[%s1 + $0x2c] sm:$0xf]
      %v190 = vld [vmem:[%s1 + $0x30] sm:$0xf]
      %v191 = vld [vmem:[%s1 + $0x34] sm:$0xf]
      %v192 = vld [vmem:[%s1 + $0x38] sm:$0xf]
      %v193 = vld [vmem:[%s1 + $0x3c] sm:$0xf]
      %v194 = vld [vmem:[%s1 + $0x40] sm:$0xf]
      %v195 = vld [vmem:[%s1 + $0x44] sm:$0xf]
      %v196 = vld [vmem:[%s1 + $0x48] sm:$0xf]
      %v197 = vld [vmem:[%s1 + $0x4c] sm:$0xf]
      %v198 = vld [vmem:[%s1 + $0x50] sm:$0xf]
      %v199 = vld [vmem:[%s1 + $0x54] sm:$0xf]
      %v200 = vld [vmem:[%s1 + $0x58] sm:$0xf]
      %v201 = vld [vmem:[%s1 + $0x5c] sm:$0xf]
      %v202 = vld [vmem:[%s1 + $0x60] sm:$0xf]
      %v203 = vld [vmem:[%s1 + $0x64] sm:$0xf]
      %v204 = vld [vmem:[%s1 + $0x68] sm:$0xf]
      %v205 = vld [vmem:[%s1 + $0x6c] sm:$0xf]
      %v206 = vld [vmem:[%s1 + $0x70] sm:$0xf]
      %v207 = vld [vmem:[%s1 + $0x74] sm:$0xf]
      %v208 = vld [vmem:[%s1 + $0x78] sm:$0xf]
      %v209 = vld [vmem:[%s1 + $0x7c] sm:$0xf]
      %v210 = vld [vmem:[%s1 + $0x80] sm:$0xf]
      %v211 = vld [vmem:[%s1 + $0x84] sm:$0xf]
      %v212 = vld [vmem:[%s1 + $0x88] sm:$0xf]
      %v213 = vld [vmem:[%s1 + $0x8c] sm:$0xf]
      %v214 = vld [vmem:[%s1 + $0x90] sm:$0xf]
      %v215 = vld [vmem:[%s1 + $0x94] sm:$0xf]
      %v216 = vld [vmem:[%s1 + $0x98] sm:$0xf]
      %v217 = vld [vmem:[%s1 + $0x9c] sm:$0xf]
      %v218 = vld [vmem:[%s1 + $0xa0] sm:$0xf]
      %v219 = vld [vmem:[%s1 + $0xa4] sm:$0xf]
      %v220 = vld [vmem:[%s1 + $0xa8] sm:$0xf]
      %v221 = vld [vmem:[%s1 + $0xac] sm:$0xf]
      %v222 = vld [vmem:[%s1 + $0xb0] sm:$0xf]
      %v223 = vld [vmem:[%s1 + $0xb4] sm:$0xf]
      %v224 = vld [vmem:[%s1 + $0xb8] sm:$0xf]
      %v225 = vld [vmem:[%s1 + $0xbc] sm:$0xf]
      %v226 = vld [vmem:[%s1 + $0xc0] sm:$0xf]
      %v227 = vld [vmem:[%s1 + $0xc4] sm:$0xf]
      %v228 = vld [vmem:[%s1 + $0xc8] sm:$0xf]
      %v229 = vld [vmem:[%s1 + $0xcc] sm:$0xf]
      %v230 = vld [vmem:[%s1 + $0xd0] sm:$0xf]
      %v231 = vld [vmem:[%s1 + $0xd4] sm:$0xf]
      %v232 = vld [vmem:[%s1 + $0xd8] sm:$0xf]
      %v233 = vld [vmem:[%s1 + $0xdc] sm:$0xf]
      %v234 = vld [vmem:[%s1 + $0xe0] sm:$0xf]
      %v235 = vld [vmem:[%s1 + $0xe4] sm:$0xf]
      %v236 = vld [vmem:[%s1 + $0xe8] sm:$0xf]
      %v237 = vld [vmem:[%s1 + $0xec] sm:$0xf]
      %v238 = vld [vmem:[%s1 + $0xf0] sm:$0xf]
      %v239 = vld [vmem:[%s1 + $0xf4] sm:$0xf]
      %v240 = vld [vmem:[%s1 + $0xf8] sm:$0xf]
      %v241 = vld [vmem:[%s1 + $0xfc] sm:$0xf]
      %v242 = vld [vmem:[%s1 + $0x100] sm:$0xf]
      %v243 = vld [vmem:[%s1 + $0x104] sm:$0xf]
      %v244 = vld [vmem:[%s1 + $0x108] sm:$0xf]
      %v245 = vld [vmem:[%s1 + $0x10c] sm:$0xf]
      %v246 = vld [vmem:[%s2] sm:$0x1]
      %v247 = vld [vmem:[%s2 + $0x1] sm:$0x1]
      %v248 = vld [vmem:[%s2 + $0x2] sm:$0x1]
      %v249 = vld [vmem:[%s169] sm:$0xff]
      %v250 = vld [vmem:[%s169 + $0x8] sm:$0xff]
      %v251 = vld [vmem:[%s169 + $0x10] sm:$0xff]
      %v252 = vld [vmem:[%s169 + $0x18] sm:$0xff]
      %v253 = vld [vmem:[%s169 + $0x20] sm:$0xff]
      %v254 = vld [vmem:[%s169 + $0x28] sm:$0xff]
      %v255 = vld [vmem:[%s169 + $0x30] sm:$0xff]
      %v256 = vld [vmem:[%s169 + $0x38] sm:$0xff]
      %v257 = vld [vmem:[%s169 + $0x40] sm:$0xff]
      %v258 = vld [vmem:[%s169 + $0x48] sm:$0xff]
      %v259 = vld [vmem:[%s169 + $0x50] sm:$0xff]
      %v260 = vld [vmem:[%s169 + $0x58] sm:$0xff]
      %v261 = vld [vmem:[%s169 + $0x60] sm:$0xff]
      %v262 = vld [vmem:[%s169 + $0x68] sm:$0xff]
      %v263 = vld [vmem:[%s169 + $0x70] sm:$0xff]
      %v264 = vld [vmem:[%s169 + $0x78] sm:$0xff]
      %v265 = vld [vmem:[%s169 + $0x80] sm:$0xff]
      %v266 = vld [vmem:[%s169 + $0x88] sm:$0xff]
      %v267 = vld [vmem:[%s169 + $0x90] sm:$0xff]
      %v268 = vld [vmem:[%s169 + $0x98] sm:$0xff]
      %v269 = vld [vmem:[%s169 + $0xa0] sm:$0xff]
      %v270 = vld [vmem:[%s169 + $0xa8] sm:$0xff]
      %v271 = vld [vmem:[%s169 + $0xb0] sm:$0xff]
      %v272 = vld [vmem:[%s169 + $0xb8] sm:$0xff]
      %v273 = vld [vmem:[%s169 + $0xc0] sm:$0xff]
      %v274 = vld [vmem:[%s169 + $0xc8] sm:$0xff]
      %v275 = vld [vmem:[%s169 + $0xd0] sm:$0xff]
      %v276 = vld [vmem:[%s169 + $0xd8] sm:$0xff]
      %v277 = vld [vmem:[%s169 + $0xe0] sm:$0xff]
      %v278 = vld [vmem:[%s169 + $0xe8] sm:$0xff]
      %v279 = vld [vmem:[%s169 + $0xf0] sm:$0xff]
      %v280 = vld [vmem:[%s169 + $0xf8] sm:$0xff]
      %v281 = vld [vmem:[%s169 + $0x100] sm:$0xff]
      %v282 = vld [vmem:[%s169 + $0x108] sm:$0xff]
      %v283 = vld [vmem:[%s169 + $0x110] sm:$0xff]
      %v284 = vld [vmem:[%s169 + $0x118] sm:$0xff]
      %v285 = vld [vmem:[%s169 + $0x120] sm:$0xff]
      %v286 = vld [vmem:[%s169 + $0x128] sm:$0xff]
      %v287 = vld [vmem:[%s169 + $0x130] sm:$0xff]
      %v288 = vld [vmem:[%s169 + $0x138] sm:$0xff]
      %v289 = vld [vmem:[%s169 + $0x140] sm:$0xff]
      %v290 = vld [vmem:[%s169 + $0x148] sm:$0xff]
      %v291 = vld [vmem:[%s169 + $0x150] sm:$0xff]
      %v292 = vld [vmem:[%s169 + $0x158] sm:$0xff]
      %v293 = vld [vmem:[%s169 + $0x160] sm:$0xff]
      %v294 = vld [vmem:[%s169 + $0x168] sm:$0xff]
      %v295 = vld [vmem:[%s169 + $0x170] sm:$0xff]
      %v296 = vld [vmem:[%s169 + $0x178] sm:$0xff]
      %v297 = vpack.c.bf16 %v252, %v249
      %v298 = vpack.c.bf16 %v253, %v250
      %v299 = vpack.c.bf16 %v254, %v251
      %v300 = vpack.c.bf16 %v258, %v255
      %v301 = vpack.c.bf16 %v259, %v256
      %v302 = vpack.c.bf16 %v260, %v257
      %v303 = vpack.c.bf16 %v264, %v261
      %v304 = vpack.c.bf16 %v265, %v262
      %v305 = vpack.c.bf16 %v266, %v263
      %v306 = vpack.c.bf16 %v270, %v267
      %v307 = vpack.c.bf16 %v271, %v268
      %v308 = vpack.c.bf16 %v272, %v269
      %v309 = vpack.c.bf16 %v276, %v273
      %v310 = vpack.c.bf16 %v277, %v274
      %v311 = vpack.c.bf16 %v278, %v275
      %v312 = vpack.c.bf16 %v282, %v279
      %v313 = vpack.c.bf16 %v283, %v280
      %v314 = vpack.c.bf16 %v284, %v281
      %v315 = vpack.c.bf16 %v288, %v285
      %v316 = vpack.c.bf16 %v289, %v286
      %v317 = vpack.c.bf16 %v290, %v287
      %v318 = vpack.c.bf16 %v294, %v291
      %v319 = vpack.c.bf16 %v295, %v292
      %v320 = vpack.c.bf16 %v296, %v293
      %v321 = vlaneseq
      %v322 = vshrl.u32 %v321, 7
      %v323 = vsub.s32 0, %v322
      %v324 = vrot.slane %v246, %v323
      %v361 = vunpack.c.l.b16 %v178
      %v362 = vunpack.c.l.b16 %v179
      %v363 = vunpack.c.l.b16 %v180
      %v364 = vunpack.c.l.b16 %v181
      %v365 = vunpack.c.l.b16 %v182
      %v366 = vunpack.c.l.b16 %v183
      %v367 = vunpack.c.l.b16 %v184
      %v368 = vunpack.c.l.b16 %v185
      %v369 = vunpack.c.l.b16 %v186
      %v370 = vunpack.c.l.b16 %v187
      %v371 = vunpack.c.l.b16 %v188
      %v372 = vunpack.c.l.b16 %v189
      %v373 = vunpack.c.l.b16 %v190
      %v374 = vunpack.c.l.b16 %v191
      %v375 = vunpack.c.l.b16 %v192
      %v376 = vunpack.c.l.b16 %v193
      %v377 = vunpack.c.l.b16 %v194
      %v378 = vunpack.c.l.b16 %v195
      %v379 = vunpack.c.l.b16 %v196
      %v380 = vunpack.c.l.b16 %v197
      %v381 = vunpack.c.l.b16 %v198
      %v382 = vunpack.c.l.b16 %v199
      %v383 = vunpack.c.l.b16 %v200
      %v384 = vunpack.c.l.b16 %v201
      %v385 = vunpack.c.l.b16 %v202
      %v386 = vunpack.c.l.b16 %v203
      %v387 = vunpack.c.l.b16 %v204
      %v388 = vunpack.c.l.b16 %v205
      %v389 = vunpack.c.l.b16 %v206
      %v390 = vunpack.c.l.b16 %v207
      %v391 = vunpack.c.l.b16 %v208
      %v392 = vunpack.c.l.b16 %v209
      %v393 = vunpack.c.l.b16 %v210
      %v394 = vunpack.c.l.b16 %v211
      %v395 = vunpack.c.l.b16 %v212
      %v396 = vunpack.c.l.b16 %v213
      %v397 = vpack.c.b16 %v362, %v361
      %v398 = vpack.c.b16 %v364, %v363
      %v399 = vpack.c.b16 %v366, %v365
      %v400 = vpack.c.b16 %v368, %v367
      %v401 = vpack.c.b16 %v370, %v369
      %v402 = vpack.c.b16 %v372, %v371
      %v403 = vpack.c.b16 %v374, %v373
      %v404 = vpack.c.b16 %v376, %v375
      %v405 = vpack.c.b16 %v378, %v377
      %v406 = vpack.c.b16 %v380, %v379
      %v407 = vpack.c.b16 %v382, %v381
      %v408 = vpack.c.b16 %v384, %v383
      %v409 = vpack.c.b16 %v386, %v385
      %v410 = vpack.c.b16 %v388, %v387
      %v411 = vpack.c.b16 %v390, %v389
      %v412 = vpack.c.b16 %v392, %v391
      %v413 = vpack.c.b16 %v394, %v393
      %v414 = vpack.c.b16 %v396, %v395
      %vm433 = vcmask 261120
      %v435 = vsel %vm433, %v299, 0
      %v438 = vsel %vm433, %v302, 0
      %v441 = vsel %vm433, %v305, 0
      %v444 = vsel %vm433, %v308, 0
      %v447 = vsel %vm433, %v311, 0
      %v450 = vsel %vm433, %v314, 0
      %v453 = vsel %vm433, %v317, 0
      %v456 = vsel %vm433, %v320, 0
      %458 = vmatprep.subr.bf16.mxu0 0
      %459 = vmatpush1.bf16.msra.mxu0 %v397
      %460 = vmatprep.subr.bf16.mxu0 0
      %461 = vmatpush1.bf16.msra.mxu0 %v398
      %462 = vmatprep.subr.bf16.mxu0 0
      %463 = vmatpush1.bf16.msra.mxu0 %v399
      %464 = vmatprep.subr.bf16.mxu0 0
      %465 = vmatpush1.bf16.msra.mxu0 %v400
      %466 = vmatprep.subr.bf16.mxu0 0
      %467 = vmatpush1.bf16.msra.mxu0 %v401
      %468 = vmatprep.subr.bf16.mxu0 0
      %469 = vmatpush1.bf16.msra.mxu0 %v402
      %470 = vmatprep.subr.bf16.mxu0 0
      %471 = vmatpush1.bf16.msra.mxu0 %v403
      %472 = vmatprep.subr.bf16.mxu0 0
      %473 = vmatpush1.bf16.msra.mxu0 %v404
      %474 = vmatprep.subr.bf16.mxu0 0
      %475 = vmatpush1.bf16.msra.mxu0 %v405
      %476 = vmatprep.subr.bf16.mxu0 0
      %477 = vmatpush1.bf16.msra.mxu0 %v406
      %478 = vmatprep.subr.bf16.mxu0 0
      %479 = vmatpush1.bf16.msra.mxu0 %v407
      %480 = vmatprep.subr.bf16.mxu0 0
      %481 = vmatpush1.bf16.msra.mxu0 %v408
      %482 = vmatprep.subr.bf16.mxu0 0
      %483 = vmatpush1.bf16.msra.mxu0 %v409
      %484 = vmatprep.subr.bf16.mxu0 0
      %485 = vmatpush1.bf16.msra.mxu0 %v410
      %486 = vmatprep.subr.bf16.mxu0 0
      %487 = vmatpush1.bf16.msra.mxu0 %v411
      %488 = vmatprep.subr.bf16.mxu0 0
      %489 = vmatpush1.bf16.msra.mxu0 %v412
      %490 = vmatprep.mubr.bf16.mxu0 %v298
      %491 = vmatmul.mubr.bf16.gmra.mrb[0].mxu0 %v297
      %v492 = vpop.f32.mrb[0].mxu0
      %v493 = vadd.f32 %v324, %v492
      %v494 = vpop.f32.mrb[0].mxu0
      %v495 = vpop.f32.mrb[0].mxu0
      %v496 = vadd.f32 %v324, %v495
      %v497 = vpop.f32.mrb[0].mxu0
      %498 = vmatprep.mubr.bf16.mxu0 %v301
      %499 = vmatmul.mubr.bf16.gmra.mrb[0].mxu0 %v300
      %v500 = vpop.f32.mrb[0].mxu0
      %v501 = vadd.f32 %v324, %v500
      %v502 = vpop.f32.mrb[0].mxu0
      %v503 = vpop.f32.mrb[0].mxu0
      %v504 = vadd.f32 %v324, %v503
      %v505 = vpop.f32.mrb[0].mxu0
      %506 = vmatprep.mubr.bf16.mxu0 %v304
      %507 = vmatmul.mubr.bf16.gmra.mrb[0].mxu0 %v303
      %v508 = vpop.f32.mrb[0].mxu0
      %v509 = vadd.f32 %v324, %v508
      %v510 = vpop.f32.mrb[0].mxu0
      %v511 = vpop.f32.mrb[0].mxu0
      %v512 = vadd.f32 %v324, %v511
      %v513 = vpop.f32.mrb[0].mxu0
      %514 = vmatprep.mubr.bf16.mxu0 %v307
      %515 = vmatmul.mubr.bf16.gmra.mrb[0].mxu0 %v306
      %v516 = vpop.f32.mrb[0].mxu0
      %v517 = vadd.f32 %v324, %v516
      %v518 = vpop.f32.mrb[0].mxu0
      %v519 = vpop.f32.mrb[0].mxu0
      %v520 = vadd.f32 %v324, %v519
      %v521 = vpop.f32.mrb[0].mxu0
      %522 = vmatprep.mubr.bf16.mxu0 %v310
      %523 = vmatmul.mubr.bf16.gmra.mrb[0].mxu0 %v309
      %v524 = vpop.f32.mrb[0].mxu0
      %v525 = vadd.f32 %v324, %v524
      %v526 = vpop.f32.mrb[0].mxu0
      %v527 = vpop.f32.mrb[0].mxu0
      %v528 = vadd.f32 %v324, %v527
      %v529 = vpop.f32.mrb[0].mxu0
      %530 = vmatprep.mubr.bf16.mxu0 %v313
      %531 = vmatmul.mubr.bf16.gmra.mrb[0].mxu0 %v312
      %v532 = vpop.f32.mrb[0].mxu0
      %v533 = vadd.f32 %v324, %v532
      %v534 = vpop.f32.mrb[0].mxu0
      %v535 = vpop.f32.mrb[0].mxu0
      %v536 = vadd.f32 %v324, %v535
      %v537 = vpop.f32.mrb[0].mxu0
      %538 = vmatprep.mubr.bf16.mxu0 %v316
      %539 = vmatmul.mubr.bf16.gmra.mrb[0].mxu0 %v315
      %v540 = vpop.f32.mrb[0].mxu0
      %v541 = vadd.f32 %v324, %v540
      %v542 = vpop.f32.mrb[0].mxu0
      %v543 = vpop.f32.mrb[0].mxu0
      %v544 = vadd.f32 %v324, %v543
      %v545 = vpop.f32.mrb[0].mxu0
      %546 = vmatprep.mubr.bf16.mxu0 %v319
      %547 = vmatmul.mubr.bf16.gmra.mrb[0].mxu0 %v318
      %v548 = vpop.f32.mrb[0].mxu0
      %v549 = vadd.f32 %v324, %v548
      %v550 = vpop.f32.mrb[0].mxu0
      %v551 = vpop.f32.mrb[0].mxu0
      %v552 = vadd.f32 %v324, %v551
      %v553 = vpop.f32.mrb[0].mxu0
      %554 = vdwg.mxu0
      %555 = vmatprep.subr.bf16.mxu0 0
      %556 = vmatpush1.bf16.msra.mxu0 %v413
      %557 = vmatprep.subr.bf16.mxu0 0
      %558 = vmatpush1.bf16.msra.mxu0 %v414
      %559 = vmatprep.subr.bf16.mxu0 0
      %560 = vmatpush1.bf16.msra.mxu0 0
      %561 = vmatprep.subr.bf16.mxu0 0
      %562 = vmatpush1.bf16.msra.mxu0 0
      %563 = vmatprep.subr.bf16.mxu0 0
      %564 = vmatpush1.bf16.msra.mxu0 0
      %565 = vmatprep.subr.bf16.mxu0 0
      %566 = vmatpush1.bf16.msra.mxu0 0
      %567 = vmatprep.subr.bf16.mxu0 0
      %568 = vmatpush1.bf16.msra.mxu0 0
      %569 = vmatprep.subr.bf16.mxu0 0
      %570 = vmatpush1.bf16.msra.mxu0 0
      %571 = vmatprep.subr.bf16.mxu0 0
      %572 = vmatpush1.bf16.msra.mxu0 0
      %573 = vmatprep.subr.bf16.mxu0 0
      %574 = vmatpush1.bf16.msra.mxu0 0
      %575 = vmatprep.subr.bf16.mxu0 0
      %576 = vmatpush1.bf16.msra.mxu0 0
      %577 = vmatprep.subr.bf16.mxu0 0
      %578 = vmatpush1.bf16.msra.mxu0 0
      %579 = vmatprep.subr.bf16.mxu0 0
      %580 = vmatpush1.bf16.msra.mxu0 0
      %581 = vmatprep.subr.bf16.mxu0 0
      %582 = vmatpush1.bf16.msra.mxu0 0
      %583 = vmatprep.subr.bf16.mxu0 0
      %584 = vmatpush1.bf16.msra.mxu0 0
      %585 = vmatprep.subr.bf16.mxu0 0
      %586 = vmatpush1.bf16.msra.mxu0 0
      %587 = vmatprep.mubr.bf16.mxu0 0
      %588 = vmatmul.mubr.bf16.gmra.mrb[0].mxu0 %v435
      %v589 = vpop.f32.mrb[0].mxu0
      %v590 = vadd.f32 %v493, %v589
      %v591 = vpop.f32.mrb[0].mxu0
      %v592 = vpop.f32.mrb[0].mxu0
      %v593 = vadd.f32 %v496, %v592
      %v594 = vpop.f32.mrb[0].mxu0
      %595 = vmatprep.mubr.bf16.mxu0 0
      %596 = vmatmul.mubr.bf16.gmra.mrb[0].mxu0 %v438
      %v597 = vpop.f32.mrb[0].mxu0
      %v598 = vadd.f32 %v501, %v597
      %v599 = vpop.f32.mrb[0].mxu0
      %v600 = vpop.f32.mrb[0].mxu0
      %v601 = vadd.f32 %v504, %v600
      %v602 = vpop.f32.mrb[0].mxu0
      %603 = vmatprep.mubr.bf16.mxu0 0
      %604 = vmatmul.mubr.bf16.gmra.mrb[0].mxu0 %v441
      %v605 = vpop.f32.mrb[0].mxu0
      %v606 = vadd.f32 %v509, %v605
      %v607 = vpop.f32.mrb[0].mxu0
      %v608 = vpop.f32.mrb[0].mxu0
      %v609 = vadd.f32 %v512, %v608
      %v610 = vpop.f32.mrb[0].mxu0
      %611 = vmatprep.mubr.bf16.mxu0 0
      %612 = vmatmul.mubr.bf16.gmra.mrb[0].mxu0 %v444
      %v613 = vpop.f32.mrb[0].mxu0
      %v614 = vadd.f32 %v517, %v613
      %v615 = vpop.f32.mrb[0].mxu0
      %v616 = vpop.f32.mrb[0].mxu0
      %v617 = vadd.f32 %v520, %v616
      %v618 = vpop.f32.mrb[0].mxu0
      %619 = vmatprep.mubr.bf16.mxu0 0
      %620 = vmatmul.mubr.bf16.gmra.mrb[0].mxu0 %v447
      %v621 = vpop.f32.mrb[0].mxu0
      %v622 = vadd.f32 %v525, %v621
      %v623 = vpop.f32.mrb[0].mxu0
      %v624 = vpop.f32.mrb[0].mxu0
      %v625 = vadd.f32 %v528, %v624
      %v626 = vpop.f32.mrb[0].mxu0
      %627 = vmatprep.mubr.bf16.mxu0 0
      %628 = vmatmul.mubr.bf16.gmra.mrb[0].mxu0 %v450
      %v629 = vpop.f32.mrb[0].mxu0
      %v630 = vadd.f32 %v533, %v629
      %v631 = vpop.f32.mrb[0].mxu0
      %v632 = vpop.f32.mrb[0].mxu0
      %v633 = vadd.f32 %v536, %v632
      %v634 = vpop.f32.mrb[0].mxu0
      %635 = vmatprep.mubr.bf16.mxu0 0
      %636 = vmatmul.mubr.bf16.gmra.mrb[0].mxu0 %v453
      %v637 = vpop.f32.mrb[0].mxu0
      %v638 = vadd.f32 %v541, %v637
      %v639 = vpop.f32.mrb[0].mxu0
      %v640 = vpop.f32.mrb[0].mxu0
      %v641 = vadd.f32 %v544, %v640
      %v642 = vpop.f32.mrb[0].mxu0
      %643 = vmatprep.mubr.bf16.mxu0 0
      %644 = vmatmul.mubr.bf16.gmra.mrb[0].mxu0 %v456
      %v645 = vpop.f32.mrb[0].mxu0
      %v646 = vadd.f32 %v549, %v645
      %v647 = vpop.f32.mrb[0].mxu0
      %v648 = vpop.f32.mrb[0].mxu0
      %v649 = vadd.f32 %v552, %v648
      %v650 = vpop.f32.mrb[0].mxu0
      %651 = vdwg.mxu0
      %v652 = vmul.f32 %v590, 0.5
      %v653 = vmul.f32 %v593, 0.5
      %v654 = vmul.f32 %v598, 0.5
      %v655 = vmul.f32 %v601, 0.5
      %v656 = vmul.f32 %v606, 0.5
      %v657 = vmul.f32 %v609, 0.5
      %v658 = vmul.f32 %v614, 0.5
      %v659 = vmul.f32 %v617, 0.5
      %v660 = vmul.f32 %v622, 0.5
      %v661 = vmul.f32 %v625, 0.5
      %v662 = vmul.f32 %v630, 0.5
      %v663 = vmul.f32 %v633, 0.5
      %v664 = vmul.f32 %v638, 0.5
      %v665 = vmul.f32 %v641, 0.5
      %v666 = vmul.f32 %v646, 0.5
      %v667 = vmul.f32 %v649, 0.5
      %v668 = vtanh.pop %v652
      %v669 = vtanh.pop %v653
      %v670 = vtanh.pop %v654
      %v671 = vtanh.pop %v655
      %v672 = vtanh.pop %v656
      %v673 = vtanh.pop %v657
      %v674 = vtanh.pop %v658
      %v675 = vtanh.pop %v659
      %v676 = vtanh.pop %v660
      %v677 = vtanh.pop %v661
      %v678 = vtanh.pop %v662
      %v679 = vtanh.pop %v663
      %v680 = vtanh.pop %v664
      %v681 = vtanh.pop %v665
      %v682 = vtanh.pop %v666
      %v683 = vtanh.pop %v667
      %v684 = vmul.f32 %v668, 0.5
      %v685 = vmul.f32 %v669, 0.5
      %v686 = vmul.f32 %v670, 0.5
      %v687 = vmul.f32 %v671, 0.5
      %v688 = vmul.f32 %v672, 0.5
      %v689 = vmul.f32 %v673, 0.5
      %v690 = vmul.f32 %v674, 0.5
      %v691 = vmul.f32 %v675, 0.5
      %v692 = vmul.f32 %v676, 0.5
      %v693 = vmul.f32 %v677, 0.5
      %v694 = vmul.f32 %v678, 0.5
      %v695 = vmul.f32 %v679, 0.5
      %v696 = vmul.f32 %v680, 0.5
      %v697 = vmul.f32 %v681, 0.5
      %v698 = vmul.f32 %v682, 0.5
      %v699 = vmul.f32 %v683, 0.5
      %v700 = vadd.f32 %v684, 0.5
      %v701 = vadd.f32 %v685, 0.5
      %v702 = vadd.f32 %v686, 0.5
      %v703 = vadd.f32 %v687, 0.5
      %v704 = vadd.f32 %v688, 0.5
      %v705 = vadd.f32 %v689, 0.5
      %v706 = vadd.f32 %v690, 0.5
      %v707 = vadd.f32 %v691, 0.5
      %v708 = vadd.f32 %v692, 0.5
      %v709 = vadd.f32 %v693, 0.5
      %v710 = vadd.f32 %v694, 0.5
      %v711 = vadd.f32 %v695, 0.5
      %v712 = vadd.f32 %v696, 0.5
      %v713 = vadd.f32 %v697, 0.5
      %v714 = vadd.f32 %v698, 0.5
      %v715 = vadd.f32 %v699, 0.5
      %v716 = vpack.c.bf16 %v701, %v700
      %v717 = vpack.c.bf16 %v703, %v702
      %v718 = vpack.c.bf16 %v705, %v704
      %v719 = vpack.c.bf16 %v707, %v706
      %v720 = vpack.c.bf16 %v709, %v708
      %v721 = vpack.c.bf16 %v711, %v710
      %v722 = vpack.c.bf16 %v713, %v712
      %v723 = vpack.c.bf16 %v715, %v714
      %v724 = vlaneseq
      %v725 = vshrl.u32 %v724, 7
      %v726 = vsub.s32 0, %v725
      %v727 = vrot.slane %v247, %v726
      %v744 = vunpack.c.l.b16 %v214
      %v745 = vunpack.c.l.b16 %v215
      %v746 = vunpack.c.l.b16 %v216
      %v747 = vunpack.c.l.b16 %v217
      %v748 = vunpack.c.l.b16 %v218
      %v749 = vunpack.c.l.b16 %v219
      %v750 = vunpack.c.l.b16 %v220
      %v751 = vunpack.c.l.b16 %v221
      %v752 = vunpack.c.l.b16 %v222
      %v753 = vunpack.c.l.b16 %v223
      %v754 = vunpack.c.l.b16 %v224
      %v755 = vunpack.c.l.b16 %v225
      %v756 = vunpack.c.l.b16 %v226
      %v757 = vunpack.c.l.b16 %v227
      %v758 = vunpack.c.l.b16 %v228
      %v759 = vunpack.c.l.b16 %v229
      %v760 = vpack.c.b16 %v745, %v744
      %v761 = vpack.c.b16 %v747, %v746
      %v762 = vpack.c.b16 %v749, %v748
      %v763 = vpack.c.b16 %v751, %v750
      %v764 = vpack.c.b16 %v753, %v752
      %v765 = vpack.c.b16 %v755, %v754
      %v766 = vpack.c.b16 %v757, %v756
      %v767 = vpack.c.b16 %v759, %v758
      %776 = vmatprep.subr.bf16.mxu0 0
      %777 = vmatpush1.bf16.msra.mxu0 %v760
      %778 = vmatprep.subr.bf16.mxu0 0
      %779 = vmatpush1.bf16.msra.mxu0 %v761
      %780 = vmatprep.subr.bf16.mxu0 0
      %781 = vmatpush1.bf16.msra.mxu0 %v762
      %782 = vmatprep.subr.bf16.mxu0 0
      %783 = vmatpush1.bf16.msra.mxu0 %v763
      %784 = vmatprep.subr.bf16.mxu0 0
      %785 = vmatpush1.bf16.msra.mxu0 %v764
      %786 = vmatprep.subr.bf16.mxu0 0
      %787 = vmatpush1.bf16.msra.mxu0 %v765
      %788 = vmatprep.subr.bf16.mxu0 0
      %789 = vmatpush1.bf16.msra.mxu0 %v766
      %790 = vmatprep.subr.bf16.mxu0 0
      %791 = vmatpush1.bf16.msra.mxu0 %v767
      %792 = vmatprep.subr.bf16.mxu0 0
      %793 = vmatpush1.bf16.msra.mxu0 0
      %794 = vmatprep.subr.bf16.mxu0 0
      %795 = vmatpush1.bf16.msra.mxu0 0
      %796 = vmatprep.subr.bf16.mxu0 0
      %797 = vmatpush1.bf16.msra.mxu0 0
      %798 = vmatprep.subr.bf16.mxu0 0
      %799 = vmatpush1.bf16.msra.mxu0 0
      %800 = vmatprep.subr.bf16.mxu0 0
      %801 = vmatpush1.bf16.msra.mxu0 0
      %802 = vmatprep.subr.bf16.mxu0 0
      %803 = vmatpush1.bf16.msra.mxu0 0
      %804 = vmatprep.subr.bf16.mxu0 0
      %805 = vmatpush1.bf16.msra.mxu0 0
      %806 = vmatprep.subr.bf16.mxu0 0
      %807 = vmatpush1.bf16.msra.mxu0 0
      %808 = vmatprep.mubr.bf16.mxu0 0
      %809 = vmatmul.mubr.bf16.gmra.mrb[0].mxu0 %v716
      %v810 = vpop.f32.mrb[0].mxu0
      %v811 = vadd.f32 %v727, %v810
      %v812 = vpop.f32.mrb[0].mxu0
      %v813 = vpop.f32.mrb[0].mxu0
      %v814 = vadd.f32 %v727, %v813
      %v815 = vpop.f32.mrb[0].mxu0
      %816 = vmatprep.mubr.bf16.mxu0 0
      %817 = vmatmul.mubr.bf16.gmra.mrb[0].mxu0 %v717
      %v818 = vpop.f32.mrb[0].mxu0
      %v819 = vadd.f32 %v727, %v818
      %v820 = vpop.f32.mrb[0].mxu0
      %v821 = vpop.f32.mrb[0].mxu0
      %v822 = vadd.f32 %v727, %v821
      %v823 = vpop.f32.mrb[0].mxu0
      %824 = vmatprep.mubr.bf16.mxu0 0
      %825 = vmatmul.mubr.bf16.gmra.mrb[0].mxu0 %v718
      %v826 = vpop.f32.mrb[0].mxu0
      %v827 = vadd.f32 %v727, %v826
      %v828 = vpop.f32.mrb[0].mxu0
      %v829 = vpop.f32.mrb[0].mxu0
      %v830 = vadd.f32 %v727, %v829
      %v831 = vpop.f32.mrb[0].mxu0
      %832 = vmatprep.mubr.bf16.mxu0 0
      %833 = vmatmul.mubr.bf16.gmra.mrb[0].mxu0 %v719
      %v834 = vpop.f32.mrb[0].mxu0
      %v835 = vadd.f32 %v727, %v834
      %v836 = vpop.f32.mrb[0].mxu0
      %v837 = vpop.f32.mrb[0].mxu0
      %v838 = vadd.f32 %v727, %v837
      %v839 = vpop.f32.mrb[0].mxu0
      %840 = vmatprep.mubr.bf16.mxu0 0
      %841 = vmatmul.mubr.bf16.gmra.mrb[0].mxu0 %v720
      %v842 = vpop.f32.mrb[0].mxu0
      %v843 = vadd.f32 %v727, %v842
      %v844 = vpop.f32.mrb[0].mxu0
      %v845 = vpop.f32.mrb[0].mxu0
      %v846 = vadd.f32 %v727, %v845
      %v847 = vpop.f32.mrb[0].mxu0
      %848 = vmatprep.mubr.bf16.mxu0 0
      %849 = vmatmul.mubr.bf16.gmra.mrb[0].mxu0 %v721
      %v850 = vpop.f32.mrb[0].mxu0
      %v851 = vadd.f32 %v727, %v850
      %v852 = vpop.f32.mrb[0].mxu0
      %v853 = vpop.f32.mrb[0].mxu0
      %v854 = vadd.f32 %v727, %v853
      %v855 = vpop.f32.mrb[0].mxu0
      %856 = vmatprep.mubr.bf16.mxu0 0
      %857 = vmatmul.mubr.bf16.gmra.mrb[0].mxu0 %v722
      %v858 = vpop.f32.mrb[0].mxu0
      %v859 = vadd.f32 %v727, %v858
      %v860 = vpop.f32.mrb[0].mxu0
      %v861 = vpop.f32.mrb[0].mxu0
      %v862 = vadd.f32 %v727, %v861
      %v863 = vpop.f32.mrb[0].mxu0
      %864 = vmatprep.mubr.bf16.mxu0 0
      %865 = vmatmul.mubr.bf16.gmra.mrb[0].mxu0 %v723
      %v866 = vpop.f32.mrb[0].mxu0
      %v867 = vadd.f32 %v727, %v866
      %v868 = vpop.f32.mrb[0].mxu0
      %v869 = vpop.f32.mrb[0].mxu0
      %v870 = vadd.f32 %v727, %v869
      %v871 = vpop.f32.mrb[0].mxu0
      %872 = vdwg.mxu0
      %v873 = vmul.f32 %v811, 0.5
      %v874 = vmul.f32 %v814, 0.5
      %v875 = vmul.f32 %v819, 0.5
      %v876 = vmul.f32 %v822, 0.5
      %v877 = vmul.f32 %v827, 0.5
      %v878 = vmul.f32 %v830, 0.5
      %v879 = vmul.f32 %v835, 0.5
      %v880 = vmul.f32 %v838, 0.5
      %v881 = vmul.f32 %v843, 0.5
      %v882 = vmul.f32 %v846, 0.5
      %v883 = vmul.f32 %v851, 0.5
      %v884 = vmul.f32 %v854, 0.5
      %v885 = vmul.f32 %v859, 0.5
      %v886 = vmul.f32 %v862, 0.5
      %v887 = vmul.f32 %v867, 0.5
      %v888 = vmul.f32 %v870, 0.5
      %v889 = vtanh.pop %v873
      %v890 = vtanh.pop %v874
      %v891 = vtanh.pop %v875
      %v892 = vtanh.pop %v876
      %v893 = vtanh.pop %v877
      %v894 = vtanh.pop %v878
      %v895 = vtanh.pop %v879
      %v896 = vtanh.pop %v880
      %v897 = vtanh.pop %v881
      %v898 = vtanh.pop %v882
      %v899 = vtanh.pop %v883
      %v900 = vtanh.pop %v884
      %v901 = vtanh.pop %v885
      %v902 = vtanh.pop %v886
      %v903 = vtanh.pop %v887
      %v904 = vtanh.pop %v888
      %v905 = vmul.f32 %v889, 0.5
      %v906 = vmul.f32 %v890, 0.5
      %v907 = vmul.f32 %v891, 0.5
      %v908 = vmul.f32 %v892, 0.5
      %v909 = vmul.f32 %v893, 0.5
      %v910 = vmul.f32 %v894, 0.5
      %v911 = vmul.f32 %v895, 0.5
      %v912 = vmul.f32 %v896, 0.5
      %v913 = vmul.f32 %v897, 0.5
      %v914 = vmul.f32 %v898, 0.5
      %v915 = vmul.f32 %v899, 0.5
      %v916 = vmul.f32 %v900, 0.5
      %v917 = vmul.f32 %v901, 0.5
      %v918 = vmul.f32 %v902, 0.5
      %v919 = vmul.f32 %v903, 0.5
      %v920 = vmul.f32 %v904, 0.5
      %v921 = vadd.f32 %v905, 0.5
      %v922 = vadd.f32 %v906, 0.5
      %v923 = vadd.f32 %v907, 0.5
      %v924 = vadd.f32 %v908, 0.5
      %v925 = vadd.f32 %v909, 0.5
      %v926 = vadd.f32 %v910, 0.5
      %v927 = vadd.f32 %v911, 0.5
      %v928 = vadd.f32 %v912, 0.5
      %v929 = vadd.f32 %v913, 0.5
      %v930 = vadd.f32 %v914, 0.5
      %v931 = vadd.f32 %v915, 0.5
      %v932 = vadd.f32 %v916, 0.5
      %v933 = vadd.f32 %v917, 0.5
      %v934 = vadd.f32 %v918, 0.5
      %v935 = vadd.f32 %v919, 0.5
      %v936 = vadd.f32 %v920, 0.5
      %v937 = vpack.c.bf16 %v922, %v921
      %v938 = vpack.c.bf16 %v924, %v923
      %v939 = vpack.c.bf16 %v926, %v925
      %v940 = vpack.c.bf16 %v928, %v927
      %v941 = vpack.c.bf16 %v930, %v929
      %v942 = vpack.c.bf16 %v932, %v931
      %v943 = vpack.c.bf16 %v934, %v933
      %v944 = vpack.c.bf16 %v936, %v935
      %v945 = vlaneseq
      %v946 = vshrl.u32 %v945, 7
      %v947 = vsub.s32 0, %v946
      %v948 = vrot.slane %v248, %v947
      %v965 = vunpack.c.l.b16 %v230
      %v966 = vunpack.c.l.b16 %v231
      %v967 = vunpack.c.l.b16 %v232
      %v968 = vunpack.c.l.b16 %v233
      %v969 = vunpack.c.l.b16 %v234
      %v970 = vunpack.c.l.b16 %v235
      %v971 = vunpack.c.l.b16 %v236
      %v972 = vunpack.c.l.b16 %v237
      %v973 = vunpack.c.l.b16 %v238
      %v974 = vunpack.c.l.b16 %v239
      %v975 = vunpack.c.l.b16 %v240
      %v976 = vunpack.c.l.b16 %v241
      %v977 = vunpack.c.l.b16 %v242
      %v978 = vunpack.c.l.b16 %v243
      %v979 = vunpack.c.l.b16 %v244
      %v980 = vunpack.c.l.b16 %v245
      %v981 = vpack.c.b16 %v966, %v965
      %v982 = vpack.c.b16 %v968, %v967
      %v983 = vpack.c.b16 %v970, %v969
      %v984 = vpack.c.b16 %v972, %v971
      %v985 = vpack.c.b16 %v974, %v973
      %v986 = vpack.c.b16 %v976, %v975
      %v987 = vpack.c.b16 %v978, %v977
      %v988 = vpack.c.b16 %v980, %v979
      %997 = vmatprep.subr.bf16.mxu0 0
      %998 = vmatpush1.bf16.msra.mxu0 %v981
      %999 = vmatprep.subr.bf16.mxu0 0
      %1000 = vmatpush1.bf16.msra.mxu0 %v982
      %1001 = vmatprep.subr.bf16.mxu0 0
      %1002 = vmatpush1.bf16.msra.mxu0 %v983
      %1003 = vmatprep.subr.bf16.mxu0 0
      %1004 = vmatpush1.bf16.msra.mxu0 %v984
      %1005 = vmatprep.subr.bf16.mxu0 0
      %1006 = vmatpush1.bf16.msra.mxu0 %v985
      %1007 = vmatprep.subr.bf16.mxu0 0
      %1008 = vmatpush1.bf16.msra.mxu0 %v986
      %1009 = vmatprep.subr.bf16.mxu0 0
      %1010 = vmatpush1.bf16.msra.mxu0 %v987
      %1011 = vmatprep.subr.bf16.mxu0 0
      %1012 = vmatpush1.bf16.msra.mxu0 %v988
      %1013 = vmatprep.subr.bf16.mxu0 0
      %1014 = vmatpush1.bf16.msra.mxu0 0
      %1015 = vmatprep.subr.bf16.mxu0 0
      %1016 = vmatpush1.bf16.msra.mxu0 0
      %1017 = vmatprep.subr.bf16.mxu0 0
      %1018 = vmatpush1.bf16.msra.mxu0 0
      %1019 = vmatprep.subr.bf16.mxu0 0
      %1020 = vmatpush1.bf16.msra.mxu0 0
      %1021 = vmatprep.subr.bf16.mxu0 0
      %1022 = vmatpush1.bf16.msra.mxu0 0
      %1023 = vmatprep.subr.bf16.mxu0 0
      %1024 = vmatpush1.bf16.msra.mxu0 0
      %1025 = vmatprep.subr.bf16.mxu0 0
      %1026 = vmatpush1.bf16.msra.mxu0 0
      %1027 = vmatprep.subr.bf16.mxu0 0
      %1028 = vmatpush1.bf16.msra.mxu0 0
      %1029 = vmatprep.mubr.bf16.mxu0 0
      %1030 = vmatmul.mubr.bf16.gmra.mrb[0].mxu0 %v937
      %v1031 = vpop.f32.mrb[0].mxu0
      %v1032 = vadd.f32 %v948, %v1031
      %v1033 = vpop.f32.mrb[0].mxu0
      %v1034 = vpop.f32.mrb[0].mxu0
      %v1035 = vadd.f32 %v948, %v1034
      %v1036 = vpop.f32.mrb[0].mxu0
      %1037 = vmatprep.mubr.bf16.mxu0 0
      %1038 = vmatmul.mubr.bf16.gmra.mrb[0].mxu0 %v938
      %v1039 = vpop.f32.mrb[0].mxu0
      %v1040 = vadd.f32 %v948, %v1039
      %v1041 = vpop.f32.mrb[0].mxu0
      %v1042 = vpop.f32.mrb[0].mxu0
      %v1043 = vadd.f32 %v948, %v1042
      %v1044 = vpop.f32.mrb[0].mxu0
      %1045 = vmatprep.mubr.bf16.mxu0 0
      %1046 = vmatmul.mubr.bf16.gmra.mrb[0].mxu0 %v939
      %v1047 = vpop.f32.mrb[0].mxu0
      %v1048 = vadd.f32 %v948, %v1047
      %v1049 = vpop.f32.mrb[0].mxu0
      %v1050 = vpop.f32.mrb[0].mxu0
      %v1051 = vadd.f32 %v948, %v1050
      %v1052 = vpop.f32.mrb[0].mxu0
      %1053 = vmatprep.mubr.bf16.mxu0 0
      %1054 = vmatmul.mubr.bf16.gmra.mrb[0].mxu0 %v940
      %v1055 = vpop.f32.mrb[0].mxu0
      %v1056 = vadd.f32 %v948, %v1055
      %v1057 = vpop.f32.mrb[0].mxu0
      %v1058 = vpop.f32.mrb[0].mxu0
      %v1059 = vadd.f32 %v948, %v1058
      %v1060 = vpop.f32.mrb[0].mxu0
      %1061 = vmatprep.mubr.bf16.mxu0 0
      %1062 = vmatmul.mubr.bf16.gmra.mrb[0].mxu0 %v941
      %v1063 = vpop.f32.mrb[0].mxu0
      %v1064 = vadd.f32 %v948, %v1063
      %v1065 = vpop.f32.mrb[0].mxu0
      %v1066 = vpop.f32.mrb[0].mxu0
      %v1067 = vadd.f32 %v948, %v1066
      %v1068 = vpop.f32.mrb[0].mxu0
      %1069 = vmatprep.mubr.bf16.mxu0 0
      %1070 = vmatmul.mubr.bf16.gmra.mrb[0].mxu0 %v942
      %v1071 = vpop.f32.mrb[0].mxu0
      %v1072 = vadd.f32 %v948, %v1071
      %v1073 = vpop.f32.mrb[0].mxu0
      %v1074 = vpop.f32.mrb[0].mxu0
      %v1075 = vadd.f32 %v948, %v1074
      %v1076 = vpop.f32.mrb[0].mxu0
      %1077 = vmatprep.mubr.bf16.mxu0 0
      %1078 = vmatmul.mubr.bf16.gmra.mrb[0].mxu0 %v943
      %v1079 = vpop.f32.mrb[0].mxu0
      %v1080 = vadd.f32 %v948, %v1079
      %v1081 = vpop.f32.mrb[0].mxu0
      %v1082 = vpop.f32.mrb[0].mxu0
      %v1083 = vadd.f32 %v948, %v1082
      %v1084 = vpop.f32.mrb[0].mxu0
      %1085 = vmatprep.mubr.bf16.mxu0 0
      %1086 = vmatmul.mubr.bf16.gmra.mrb[0].mxu0 %v944
      %v1087 = vpop.f32.mrb[0].mxu0
      %v1088 = vadd.f32 %v948, %v1087
      %v1089 = vpop.f32.mrb[0].mxu0
      %v1090 = vpop.f32.mrb[0].mxu0
      %v1091 = vadd.f32 %v948, %v1090
      %v1092 = vpop.f32.mrb[0].mxu0
      %1093 = vdwg.mxu0
      %vm1094 = vcmask 130048
      %1095 = vst.msk [vmem:[%s175] sm:$0xff] %vm1094, %v1032
      %1096 = vst.msk [vmem:[%s175 + $0x8] sm:$0xff] %vm1094, %v1035
      %1097 = vst.msk [vmem:[%s175 + $0x10] sm:$0xff] %vm1094, %v1040
      %1098 = vst.msk [vmem:[%s175 + $0x18] sm:$0xff] %vm1094, %v1043
      %1099 = vst.msk [vmem:[%s175 + $0x20] sm:$0xff] %vm1094, %v1048
      %1100 = vst.msk [vmem:[%s175 + $0x28] sm:$0xff] %vm1094, %v1051
      %1101 = vst.msk [vmem:[%s175 + $0x30] sm:$0xff] %vm1094, %v1056
      %1102 = vst.msk [vmem:[%s175 + $0x38] sm:$0xff] %vm1094, %v1059
      %1103 = vst.msk [vmem:[%s175 + $0x40] sm:$0xff] %vm1094, %v1064
      %1104 = vst.msk [vmem:[%s175 + $0x48] sm:$0xff] %vm1094, %v1067
      %1105 = vst.msk [vmem:[%s175 + $0x50] sm:$0xff] %vm1094, %v1072
      %1106 = vst.msk [vmem:[%s175 + $0x58] sm:$0xff] %vm1094, %v1075
      %1107 = vst.msk [vmem:[%s175 + $0x60] sm:$0xff] %vm1094, %v1080
      %1108 = vst.msk [vmem:[%s175 + $0x68] sm:$0xff] %vm1094, %v1083
      %1109 = vst.msk [vmem:[%s175 + $0x70] sm:$0xff] %vm1094, %v1088
      %1110 = vst.msk [vmem:[%s175 + $0x78] sm:$0xff] %vm1094, %v1091
      %s1111 = smul.u32 16, %s14
      %p1112 = scmp.lt.s32.totalorder %s1111, 31
      %s1113 = scalar_select %p1112, %s1111, 31
      %s1114 = smul.addr %s1113, 8
      %s1115 = scalar_lea.vmem %s3, %s1114
      // Predicated region
      $region33: #{fc_decoder_forward.1} parent=31 // pred_check
        %p1116 = pneg %p100
      $region34: #{fc_decoder_forward.1} parent=31 // pred_check_branch
        %1118 = sbr.rel (%p1116) target = $region36
      $region35: #{fc_decoder_forward.1} parent=31 // pred_region
        %s1119 = smul.u32 16, %s14
      $region36: #{fc_decoder_forward.1} parent=31 // pred_fallthru
        _
    $region32: #{fc_decoder_forward.1} parent=5 // pred_fallthru
      _
    %p1120 = scmp.le.s32.totalorder 2, %s9
    // Predicated region
    $region37: #{fc_decoder_forward.1} parent=5 // pred_check
      %p1121 = pneg %p1120
    $region38: #{fc_decoder_forward.1} parent=5 // pred_check_branch
      %1123 = sbr.rel (%p1121) target = $region40
    $region39: #{fc_decoder_forward.1} parent=5 // pred_region
      %s1124 = ssub.s32 %s9, 2
      // Predicated region
      $region41: #{fc_decoder_forward.1} parent=39 // pred_check
        %p1125 = pneg %p106
      $region42: #{fc_decoder_forward.1} parent=39 // pred_check_branch
        %1127 = sbr.rel (%p1125) target = $region44
      $region43: #{fc_decoder_forward.1} parent=39 // pred_region
        %s1128 = smul.u32 16, %s15
        %p1129 = scmp.lt.s32.totalorder %s1128, 31
        %s1130 = scalar_select %p1129, %s1128, 31
        %s1131 = smul.addr %s1130, 8
        %s1132 = scalar_lea.vmem %s3, %s1131
      $region44: #{fc_decoder_forward.1} parent=39 // pred_fallthru
        _
    $region40: #{fc_decoder_forward.1} parent=5 // pred_fallthru
      _
  $region6: #{fc_decoder_forward.1} parent=0 // loop_footer
    %s13 = sadd.s32 1, %s9
  $region7: #{fc_decoder_forward.1} parent=0 // loop_footer_branch
    %8 = sbr.rel target = $region3
  $region8: #{fc_decoder_forward.1} parent=0 // loop_exit
    _

</llo_original>
